<compile_context>
chip_gen: v5e
topology: v5e:2x2
jax: 0.10.0
libtpu: 0.0.40
codegen_flags: <defaults>
</compile_context>

<pallas_src>
import functools

import jax
import jax.numpy as jnp
from jax import lax
from jax.experimental import pallas as pl
from jax.experimental.pallas import tpu as pltpu


def _cnn_kernel(x_ref, w_ref, b_ref, o_ref, *, chunk):
    """Fused im2col-conv1d + global max-pool + bias + relu.

    x_ref: (TN, L_out_p, KC_p)  im2col'd input tile, bf16, VMEM.
                                L_out_p is a multiple of 8 (edge-padded in the
                                wrapper, so padded time rows never win the max);
                                KC_p = K*C_in padded to a multiple of 128.
    w_ref: (KC_p, C_out_p)      im2col weights, bf16, VMEM.
    b_ref: (1, C_out_p)         conv bias, f32, VMEM.
    o_ref: (TN, C_out_p)        output tile, f32, VMEM (lane-dense last dim).
    """
    tn, l_out_p, kc_p = x_ref.shape
    c_out_p = o_ref.shape[-1]
    w = w_ref[...]
    b = b_ref[...]

    def compute(xc):
        rows = xc.shape[0]
        # (rows, L_out_p, KC_p) -> (rows*L_out_p, KC_p): layout-free because
        # L_out_p is a multiple of 8 (sublane-aligned merge).
        lhs = xc.reshape(rows * l_out_p, kc_p)
        y = jnp.dot(lhs, w, preferred_element_type=jnp.float32)
        # adaptive_max_pool1d(1) == max over the length axis; bias + ReLU are
        # applied AFTER the pool (bias constant over L, ReLU monotone =>
        # mathematically identical, far less VPU work).
        m = jnp.max(y.reshape(rows, l_out_p, c_out_p), axis=1)
        return jnp.maximum(m + b, 0.0).astype(o_ref.dtype)

    n_chunks = tn // chunk
    if n_chunks == 1:
        o_ref[...] = compute(x_ref[...])
    else:
        def body(c, carry):
            row0 = pl.multiple_of(c * chunk, chunk)
            o_ref[pl.ds(row0, chunk), :] = compute(x_ref[pl.ds(row0, chunk)])
            return carry
        lax.fori_loop(0, n_chunks, body, 0)


def cnn_forward(x_ncl, weight, bias, *, kernel_size=5, pad_size=1,
                batch_tile=256):
    """x_ncl:  (N, C_in, L) float32 (PyTorch NCL layout).
    weight: (C_out, C_in, K) as in nn.Conv1d.  bias: (C_out,).
    Returns (N, C_out)."""
    n, c_in, l = x_ncl.shape
    c_out = weight.shape[0]
    l_pad = l + 2 * pad_size
    l_out = l_pad - kernel_size + 1
    assert l_out >= 1, "sequence too short for this kernel/pad"

    kc = kernel_size * c_in
    kc_p = ((kc + 127) // 128) * 128          # lane-dense contraction dim
    c_out_p = ((c_out + 127) // 128) * 128    # lane-dense output dim
    l_out_p = ((l_out + 7) // 8) * 8          # sublane-aligned time dim

    # ---- Wrapper-side im2col (one fused XLA cast/pad/transpose/concat pass) --
    # (N, C_in, L) f32 -> (N, L_pad, C_in) bf16 -> (N, L_out, K*C_in).
    x_bf = x_ncl.astype(jnp.bfloat16)
    x_pad = jnp.pad(x_bf, ((0, 0), (0, 0), (pad_size, pad_size)))
    x_nlc = jnp.transpose(x_pad, (0, 2, 1))                        # (N, L_pad, C_in)
    cols = [x_nlc[:, k:k + l_out, :] for k in range(kernel_size)]
    x_i2c = jnp.concatenate(cols, axis=-1)                          # (N, L_out, K*C_in)
    # Edge-pad the time axis (replicated real rows can never exceed the true
    # max -> no in-kernel masking) and zero-pad the contraction dim to 128.
    if l_out_p != l_out:
        x_i2c = jnp.pad(x_i2c, ((0, 0), (0, l_out_p - l_out), (0, 0)), mode="edge")
    x_i2c = jnp.pad(x_i2c, ((0, 0), (0, 0), (0, kc_p - kc)))
    # TODO(synk): accept an NLC (or pre-im2col'd) input from the producer so
    # this wrapper pass can be fused into the upstream op.

    # Weights -> (K*C_in, C_out): w2[k*C_in + i, o] = weight[o, i, k], matching
    # the concat order above; pad both dims (zero cols => relu(0)=0, sliced).
    w2 = jnp.transpose(weight, (2, 1, 0)).reshape(kc, c_out).astype(jnp.bfloat16)
    w2 = jnp.pad(w2, ((0, kc_p - kc), (0, c_out_p - c_out)))
    b2 = jnp.pad(bias.astype(jnp.float32), (0, c_out_p - c_out)).reshape(1, c_out_p)

    # ---- Batch tiling: even grid split for v7x's 2 TCs, VMEM-safe for v5e ----
    if n <= batch_tile:
        tn = n
    else:
        steps = -(-n // batch_tile)
        if steps % 2:
            steps += 1                      # even split across the 2 TensorCores
        tn = -(-n // steps)
        tn = -(-tn // 8) * 8                # multiple of 8

    def _tile_bytes(t):  # double-buffered bf16 input tile + f32 output tile
        return 2 * t * l_out_p * kc_p * 2 + 2 * t * c_out_p * 4
    while tn > 8 and _tile_bytes(tn) > 12 * 1024 * 1024:
        tn = max(8, ((tn // 2) + 7) // 8 * 8)

    grid = (pl.cdiv(n, tn),)
    chunk = 8 if tn % 8 == 0 else tn        # batch sub-chunk inside the kernel

    kernel = functools.partial(_cnn_kernel, chunk=chunk)

    flops = 2 * n * l_out * kc * c_out
    bytes_accessed = (x_i2c.size * 2 + w2.size * 2
                      + b2.size * 4 + n * c_out_p * 4)
    cost = pl.CostEstimate(flops=flops, transcendentals=0,
                           bytes_accessed=bytes_accessed)

    out_p = pl.pallas_call(
        kernel,
        out_shape=jax.ShapeDtypeStruct((n, c_out_p), jnp.float32),
        grid=grid,
        in_specs=[
            pl.BlockSpec((tn, l_out_p, kc_p), lambda i: (i, 0, 0)),
            pl.BlockSpec((kc_p, c_out_p), lambda i: (0, 0)),
            pl.BlockSpec((1, c_out_p), lambda i: (0, 0)),
        ],
        out_specs=pl.BlockSpec((tn, c_out_p), lambda i: (i, 0)),
        compiler_params=pltpu.CompilerParams(
            dimension_semantics=("parallel",)),
        cost_estimate=cost,
    )(x_i2c, w2, b2)

    return out_p[:, :c_out].astype(x_ncl.dtype)


def _reference(x_ncl, weight, bias, *, kernel_size=5, pad_size=1):
    """Pure-JAX reference matching PyTorch semantics, with inputs rounded to
    bf16 (same rounding the kernel applies) and f32 accumulation."""
    xb = x_ncl.astype(jnp.bfloat16).astype(jnp.float32)
    wb = weight.astype(jnp.bfloat16).astype(jnp.float32)
    y = jax.lax.conv_general_dilated(
        xb, wb,
        window_strides=(1,),
        padding=[(pad_size, pad_size)],
        dimension_numbers=("NCH", "OIH", "NCH"),
    ) + bias[None, :, None]
    y = jnp.maximum(y, 0.0)
    return jnp.max(y, axis=2)


if __name__ == "__main__":
    # Small shapes consistent with the module's forward: x is (batch, in_chan, seq_len).
    batch, in_chan, out_chan, seq_len = 2, 4, 8, 16
    kernel_size, pad_size = 5, 1

    key = jax.random.PRNGKey(0)
    kx, kw, kb = jax.random.split(key, 3)

    x = jax.random.normal(kx, (batch, in_chan, seq_len), dtype=jnp.float32)

    # Deterministic Conv1d-style init: U(-sqrt(k), sqrt(k)), k = 1/(in_chan*kernel_size)
    bound = (1.0 / (in_chan * kernel_size)) ** 0.5
    weight = jax.random.uniform(kw, (out_chan, in_chan, kernel_size),
                                minval=-bound, maxval=bound, dtype=jnp.float32)
    bias = jax.random.uniform(kb, (out_chan,),
                              minval=-bound, maxval=bound, dtype=jnp.float32)

    out = cnn_forward(x, weight, bias, kernel_size=kernel_size, pad_size=pad_size)
    out = jax.block_until_ready(out)

    ref = _reference(x, weight, bias, kernel_size=kernel_size, pad_size=pad_size)
    assert out.shape == (batch, out_chan)
    assert jnp.allclose(out, ref, atol=1e-3, rtol=1e-3), "mismatch vs reference"

    print("KERNEL_OK")
</pallas_src>

<mosaic_0001>
module attributes {stable_mosaic.version = 11 : i64} {
  func.func @_cnn_kernel(%arg0: i32, %arg1: memref<2x16x128xbf16, #tpu.memory_space<vmem>>, %arg2: memref<128x128xbf16, #tpu.memory_space<vmem>>, %arg3: memref<1x128xf32, #tpu.memory_space<vmem>>, %arg4: memref<2x128xf32, #tpu.memory_space<vmem>>) attributes {dimension_semantics = [#tpu.dimension_semantics<parallel>], iteration_bounds = array<i64: 1>, scalar_prefetch = 0 : i64, scratch_operands = 0 : i64, tpu.core_type = #tpu.core_type<tc>, window_params = [{transform_indices = @transform_0, window_bounds = array<i64: 2, 16, 128>}, {pipeline_mode = #tpu.pipeline_mode<synchronous>, transform_indices = @transform_1, window_bounds = array<i64: 128, 128>}, {pipeline_mode = #tpu.pipeline_mode<synchronous>, transform_indices = @transform_2, window_bounds = array<i64: 1, 128>}, {transform_indices = @transform_3, window_bounds = array<i64: 2, 128>}]} {
    %c0 = arith.constant 0 : index
    %c0_0 = arith.constant 0 : index
    %0 = vector.load %arg2[%c0, %c0_0] : memref<128x128xbf16, #tpu.memory_space<vmem>>, vector<128x128xbf16>
    %c0_1 = arith.constant 0 : index
    %c0_2 = arith.constant 0 : index
    %1 = vector.load %arg3[%c0_1, %c0_2] : memref<1x128xf32, #tpu.memory_space<vmem>>, vector<1x128xf32>
    %c0_3 = arith.constant 0 : index
    %c0_4 = arith.constant 0 : index
    %c0_5 = arith.constant 0 : index
    %2 = vector.load %arg1[%c0_3, %c0_4, %c0_5] : memref<2x16x128xbf16, #tpu.memory_space<vmem>>, vector<2x16x128xbf16>
    %3 = vector.shape_cast %2 : vector<2x16x128xbf16> to vector<32x128xbf16>
    %cst = arith.constant dense<0.000000e+00> : vector<32x128xf32>
    %4 = tpu.matmul %3, %0, %cst {dimension_numbers = #tpu.dot_dimension_numbers<[1], [0], [0], [1], [0, 0, 1, 1], [], []>} : vector<32x128xbf16>, vector<128x128xbf16>, vector<32x128xf32> -> vector<32x128xf32>
    %5 = vector.shape_cast %4 : vector<32x128xf32> to vector<2x16x128xf32>
    %cst_6 = arith.constant dense<0xFF800000> : vector<2x128xf32>
    %6 = vector.multi_reduction <maximumf>, %5, %cst_6 [1] : vector<2x16x128xf32> to vector<2x128xf32>
    %7 = vector.broadcast %1 : vector<1x128xf32> to vector<2x128xf32>
    %8 = arith.addf %6, %7 : vector<2x128xf32>
    %cst_7 = arith.constant 0.000000e+00 : f32
    %9 = vector.broadcast %cst_7 : f32 to vector<2x128xf32>
    %10 = arith.maximumf %8, %9 : vector<2x128xf32>
    %c0_8 = arith.constant 0 : index
    %c0_9 = arith.constant 0 : index
    %11 = vector.load %arg4[%c0_8, %c0_9] : memref<2x128xf32, #tpu.memory_space<vmem>>, vector<2x128xf32>
    tpu.vector_store %arg4[%c0_8, %c0_9], %10 {strides = array<i32>} : memref<2x128xf32, #tpu.memory_space<vmem>>, vector<2x128xf32>,
    return
  }
  func.func @transform_0(%arg0: i32) -> (i32, i32, i32) {
    %c0_i32 = arith.constant 0 : i32
    %c0_i32_0 = arith.constant 0 : i32
    %c0_i32_1 = arith.constant 0 : i32
    return %arg0, %c0_i32, %c0_i32_0 : i32, i32, i32
  }
  func.func @transform_1(%arg0: i32) -> (i32, i32) {
    %c0_i32 = arith.constant 0 : i32
    %c0_i32_0 = arith.constant 0 : i32
    %c0_i32_1 = arith.constant 0 : i32
    return %c0_i32, %c0_i32_0 : i32, i32
  }
  func.func @transform_2(%arg0: i32) -> (i32, i32) {
    %c0_i32 = arith.constant 0 : i32
    %c0_i32_0 = arith.constant 0 : i32
    %c0_i32_1 = arith.constant 0 : i32
    return %c0_i32, %c0_i32_0 : i32, i32
  }
  func.func @transform_3(%arg0: i32) -> (i32, i32) {
    %c0_i32 = arith.constant 0 : i32
    %c0_i32_0 = arith.constant 0 : i32
    return %arg0, %c0_i32 : i32, i32
  }
}

</mosaic_0001>

<llo_original>
// kernel: tpu_custom_call.1
$region0: #{tpu_custom_call.1}
  #allocation0 [shape = 'u32[]', space=smem, size = 0x4, offset = 0x4, fixed_abs, tag = 'smem constant byte address 0x4 - core index']
  #allocation1 [shape = 'u32[72,128]{1,0:T(1,128)}', space=vmem, size = 0x9000, scoped, tag = 'internal scratch']
  %s0 = inlined_call_operand.hbm [shape: bf16[2,16,128], index: 0, kind: input, shape index: {}]
  %s1 = inlined_call_operand.hbm [shape: bf16[128,128], index: 1, kind: input, shape index: {}]
  %s2 = inlined_call_operand.vmem [shape: f32[1,128], index: 2, kind: input, shape index: {}]
  %s3 = inlined_call_operand.hbm [shape: f32[2,128], index: 3, kind: output, shape index: {}]
  %s4 = sld [smem:[#allocation0]]
  $region30: #{tpu_custom_call.1} parent=0
    _
  %s6 = ssub.s32 1, %s4
  %s7 = scalar_select 0, %s6, %s4
  $region1: #{tpu_custom_call.1} parent=0
    #allocation2 [shape = 'u8[8192]{0}', space=vmem, size = 0x2000, scoped, tag = 'input window, operand 0, single buffered']
    #allocation3 [shape = 's32[1]{0}', space=sflag, size = 0x4, scoped, tag = 'scoped memory for tpu_custom_call.1']
    #allocation4 [shape = 's32[1]{0}', space=sflag, size = 0x4, scoped, tag = 'scoped memory for tpu_custom_call.1']
    #allocation5 [shape = 'u8[32768]{0}', space=vmem, size = 0x8000, scoped, tag = 'input window, operand 1, single buffered']
    #allocation6 [shape = 's32[1]{0}', space=sflag, size = 0x4, scoped, tag = 'scoped memory for tpu_custom_call.1']
    #allocation7 [shape = 'u8[1024]{0}', space=vmem, size = 0x400, scoped, tag = 'output window, operand 0, single buffered']
    %8 = vsyncpa [#allocation3], 0
    %9 = vsyncpa [#allocation6], 0
    %10 = vsyncpa [#allocation4], 0
    // Predicated region
    $region2: #{tpu_custom_call.1} parent=1 // pred_check
      _
    $region3: #{tpu_custom_call.1} parent=1 // pred_check_branch
      %12 = sbr.rel (0) target = $region5
    $region4: #{tpu_custom_call.1} parent=1 // pred_region
      %14 = vsyncadd [#allocation3], 0
      %s15 = sshll.u32 %s0, 4
      %s16 = int_to_ptr.hbm [resolvable:$true] %s15
      %s17 = sshll.u32 [#allocation2], 4
      %s18 = int_to_ptr.vmem [resolvable:$true] %s17
      %23 = dma.hbm_to_vmem [thread:$0]  %s16, 256, %s18, [#allocation3], 64, 64, 4
    $region5: #{tpu_custom_call.1} parent=1 // pred_fallthru
      _
    // Predicated region
    $region6: #{tpu_custom_call.1} parent=1 // pred_check
      _
    $region7: #{tpu_custom_call.1} parent=1 // pred_check_branch
      %25 = sbr.rel (0) target = $region9
    $region8: #{tpu_custom_call.1} parent=1 // pred_region
      %27 = vsyncadd [#allocation6], 0
      %s28 = sshll.u32 %s1, 4
      %s29 = int_to_ptr.hbm [resolvable:$true] %s28
      %s30 = sshll.u32 [#allocation5], 4
      %s31 = int_to_ptr.vmem [resolvable:$true] %s30
      %36 = dma.hbm_to_vmem [thread:$0]  %s29, 1024, %s31, [#allocation6], 64, 64, 4
    $region9: #{tpu_custom_call.1} parent=1 // pred_fallthru
      _
    // Predicated region
    $region10: #{tpu_custom_call.1} parent=1 // pred_check
      _
    $region11: #{tpu_custom_call.1} parent=1 // pred_check_branch
      %38 = sbr.rel (0) target = $region13
    $region12: #{tpu_custom_call.1} parent=1 // pred_region
      _
    $region13: #{tpu_custom_call.1} parent=1 // pred_fallthru
      _
    // Predicated region
    $region14: #{tpu_custom_call.1} parent=1 // pred_check
      _
    $region15: #{tpu_custom_call.1} parent=1 // pred_check_branch
      %40 = sbr.rel (0) target = $region17
    $region16: #{tpu_custom_call.1} parent=1 // pred_region
      %42 = dma.done [#allocation3], 256
    $region17: #{tpu_custom_call.1} parent=1 // pred_fallthru
      _
    // Predicated region
    $region18: #{tpu_custom_call.1} parent=1 // pred_check
      _
    $region19: #{tpu_custom_call.1} parent=1 // pred_check_branch
      %44 = sbr.rel (0) target = $region21
    $region20: #{tpu_custom_call.1} parent=1 // pred_region
      %46 = dma.done [#allocation6], 1024
    $region21: #{tpu_custom_call.1} parent=1 // pred_fallthru
      _
    %v47 = vld [vmem:[#allocation5] sm:$0xf]
    %v48 = vld [vmem:[#allocation5 + $0x4] sm:$0xf]
    %v49 = vld [vmem:[#allocation5 + $0x8] sm:$0xf]
    %v50 = vld [vmem:[#allocation5 + $0xc] sm:$0xf]
    %v51 = vld [vmem:[#allocation5 + $0x10] sm:$0xf]
    %v52 = vld [vmem:[#allocation5 + $0x14] sm:$0xf]
    %v53 = vld [vmem:[#allocation5 + $0x18] sm:$0xf]
    %v54 = vld [vmem:[#allocation5 + $0x1c] sm:$0xf]
    %v55 = vld [vmem:[#allocation5 + $0x20] sm:$0xf]
    %v56 = vld [vmem:[#allocation5 + $0x24] sm:$0xf]
    %v57 = vld [vmem:[#allocation5 + $0x28] sm:$0xf]
    %v58 = vld [vmem:[#allocation5 + $0x2c] sm:$0xf]
    %v59 = vld [vmem:[#allocation5 + $0x30] sm:$0xf]
    %v60 = vld [vmem:[#allocation5 + $0x34] sm:$0xf]
    %v61 = vld [vmem:[#allocation5 + $0x38] sm:$0xf]
    %v62 = vld [vmem:[#allocation5 + $0x3c] sm:$0xf]
    %v63 = vld [vmem:[%s2] sm:$0x1]
    %v64 = vld [vmem:[#allocation2] sm:$0xf]
    %v65 = vld [vmem:[#allocation2 + $0x4] sm:$0xf]
    %v66 = vld [vmem:[#allocation2 + $0x8] sm:$0xf]
    %v67 = vld [vmem:[#allocation2 + $0xc] sm:$0xf]
    %v72 = vunpack.c.l.b16 %v64
    %v73 = vunpack.c.l.b16 %v65
    %v74 = vunpack.c.l.b16 %v66
    %v75 = vunpack.c.l.b16 %v67
    %v76 = vpack.c.b16 %v73, %v72
    %v77 = vpack.c.b16 %v75, %v74
    %v96 = vunpack.c.l.b16 %v47
    %v97 = vunpack.c.l.b16 %v48
    %v98 = vunpack.c.l.b16 %v49
    %v99 = vunpack.c.l.b16 %v50
    %v100 = vunpack.c.l.b16 %v51
    %v101 = vunpack.c.l.b16 %v52
    %v102 = vunpack.c.l.b16 %v53
    %v103 = vunpack.c.l.b16 %v54
    %v104 = vunpack.c.l.b16 %v55
    %v105 = vunpack.c.l.b16 %v56
    %v106 = vunpack.c.l.b16 %v57
    %v107 = vunpack.c.l.b16 %v58
    %v108 = vunpack.c.l.b16 %v59
    %v109 = vunpack.c.l.b16 %v60
    %v110 = vunpack.c.l.b16 %v61
    %v111 = vunpack.c.l.b16 %v62
    %v112 = vpack.c.b16 %v97, %v96
    %v113 = vpack.c.b16 %v99, %v98
    %v114 = vpack.c.b16 %v101, %v100
    %v115 = vpack.c.b16 %v103, %v102
    %v116 = vpack.c.b16 %v105, %v104
    %v117 = vpack.c.b16 %v107, %v106
    %v118 = vpack.c.b16 %v109, %v108
    %v119 = vpack.c.b16 %v111, %v110
    %128 = vmatpush.bf16.msra.mxu0 %v119
    %129 = vmatpush.bf16.msra.mxu0 %v118
    %130 = vmatpush.bf16.msra.mxu0 %v117
    %131 = vmatpush.bf16.msra.mxu0 %v116
    %132 = vmatpush.bf16.msra.mxu0 %v115
    %133 = vmatpush.bf16.msra.mxu0 %v114
    %134 = vmatpush.bf16.msra.mxu0 %v113
    %135 = vmatpush.bf16.msra.mxu0 %v112
    %136 = vmatmul.bf16.gmra.mxu0 %v76
    %v137 = vpop.f32.mrf.mxu0
    %v138 = vadd.f32 0.0, %v137
    %v139 = vpop.f32.mrf.mxu0
    %v140 = vadd.f32 0.0, %v139
    %141 = vmatmul.bf16.gmra.mxu0 %v77
    %v142 = vpop.f32.mrf.mxu0
    %v143 = vadd.f32 0.0, %v142
    %v144 = vpop.f32.mrf.mxu0
    %v145 = vadd.f32 0.0, %v144
    %146 = vdwg.mxu0
    %v147 = vmax.f32 %v138, %v140
    %v148 = vrot.slane %v147, 4
    %v149 = vmax.f32 %v147, %v148
    %v150 = vrot.slane %v149, 2
    %v151 = vmax.f32 %v149, %v150
    %v152 = vrot.slane %v151, 1
    %v153 = vmax.f32 %v151, %v152
    %v154 = vmax.f32 %v143, %v145
    %v155 = vrot.slane %v154, 4
    %v156 = vmax.f32 %v154, %v155
    %v157 = vrot.slane %v156, 2
    %v158 = vmax.f32 %v156, %v157
    %v159 = vrot.slane %v158, 1
    %v160 = vmax.f32 %v158, %v159
    %v162 = vperm.slane %v63, 0
    %v164 = vadd.f32 %v153, %v162
    %v165 = vadd.f32 %v160, %v162
    %v166 = vmax.f32 %v164, 0.0
    %v167 = vmax.f32 %v165, 0.0
    %v170 = vrot.slane %v167, 7
    %vm171 = vcmask 1041409
    %v172 = vsel %vm171, %v170, %v166
    %174 = vst [vmem:[#allocation7] sm:$0x3] %v172
    // Predicated region
    $region22: #{tpu_custom_call.1} parent=1 // pred_check
      _
    $region23: #{tpu_custom_call.1} parent=1 // pred_check_branch
      %176 = sbr.rel (0) target = $region25
    $region24: #{tpu_custom_call.1} parent=1 // pred_region
      %178 = vsyncadd [#allocation4], 0
      %s180 = sshll.u32 [#allocation7], 4
      %s181 = int_to_ptr.vmem [resolvable:$true] %s180
      %s182 = sshll.u32 %s3, 4
      %s183 = int_to_ptr.hbm [resolvable:$true] %s182
      %185 = dma.vmem_to_hbm [thread:$0]  %s181, 32, %s183, [#allocation4]
    $region25: #{tpu_custom_call.1} parent=1 // pred_fallthru
      _
    // Predicated region
    $region26: #{tpu_custom_call.1} parent=1 // pred_check
      _
    $region27: #{tpu_custom_call.1} parent=1 // pred_check_branch
      %187 = sbr.rel (0) target = $region29
    $region28: #{tpu_custom_call.1} parent=1 // pred_region
      %189 = dma.done [#allocation4], 32
    $region29: #{tpu_custom_call.1} parent=1 // pred_fallthru
      _
    %190 = vsyncpa [#allocation3], 1
    %191 = vsyncpa [#allocation6], 1
    %192 = vsyncpa [#allocation4], 1

</llo_original>
